<compile_context>
chip_gen: v6e
topology: v6e:2x2x1
jax: 0.10.0
libtpu: 0.0.40
codegen_flags: <defaults>
</compile_context>

<pallas_src>
import functools

import jax
import jax.numpy as jnp
from jax.experimental import pallas as pl
from jax.experimental.pallas import tpu as pltpu

LANE = 128  # TPU vreg lane width


def _round_up(n, m):
    return (n + m - 1) // m * m


def _nbytes(x):
    return int(x.size) * x.dtype.itemsize


def _vmem_limit_bytes():
    """~75% of physical VMEM (96 MiB v5e/v6e, 48 MiB v7x); None -> compiler default."""
    try:
        return int(pltpu.get_tpu_info().vmem_capacity_bytes) * 3 // 4
    except Exception:  # pragma: no cover - defensive; fall back to default limit
        return None


# ---------------------------------------------------------------------------
# Kernels
# ---------------------------------------------------------------------------
def _encoder_fused_kernel(x_ref, adj_ref, w1_ref, b1_ref, wout_ref, bout_ref, out_ref):
    """Whole-graph fused kernel (adj VMEM-resident, loaded from HBM once)."""
    adj = adj_ref[...]                                                    # bf16 [N, N]
    # Layer 1: h = relu(adj @ (x @ W1) + b1)                         f32 [N, Hpad]
    s1 = jnp.dot(x_ref[...], w1_ref[...], preferred_element_type=jnp.float32)
    h = jnp.dot(adj, s1.astype(jnp.bfloat16),
                preferred_element_type=jnp.float32) + b1_ref[...]
    h = jnp.maximum(h, 0.0)
    # Fused mu|logvar heads: out = adj @ (h @ Wout) + bout           f32 [N, Opad]
    s2 = jnp.dot(h, wout_ref[...], preferred_element_type=jnp.float32)
    out = jnp.dot(adj, s2.astype(jnp.bfloat16),
                  preferred_element_type=jnp.float32) + bout_ref[...]
    out_ref[...] = out.astype(out_ref.dtype)


def _prop_kernel(adj_ref, m_ref, b_ref, out_ref, *, relu):
    """One row tile of a GCN propagation: out_tile = [relu](adj_tile @ m + b)."""
    acc = jnp.dot(adj_ref[...], m_ref[...],
                  preferred_element_type=jnp.float32) + b_ref[...]
    if relu:
        acc = jnp.maximum(acc, 0.0)
    out_ref[...] = acc.astype(out_ref.dtype)


def _propagate(adj_bf16, m_bf16, bias, *, relu, row_tile, true_cols):
    """Row-tiled adj propagation. adj is streamed per tile; m/bias stay VMEM-resident."""
    n = adj_bf16.shape[0]
    fdim = m_bf16.shape[1]
    flops = 2 * n * n * true_cols
    bytes_accessed = (_nbytes(adj_bf16) + _nbytes(m_bf16) + _nbytes(bias)
                      + n * fdim * 4)
    return pl.pallas_call(
        functools.partial(_prop_kernel, relu=relu),
        out_shape=jax.ShapeDtypeStruct((n, fdim), jnp.float32),
        grid_spec=pltpu.PrefetchScalarGridSpec(
            num_scalar_prefetch=0,
            grid=(n // row_tile,),
            in_specs=[
                pl.BlockSpec((row_tile, n), lambda i: (i, 0)),   # adj row strip (streamed)
                pl.BlockSpec((n, fdim), lambda i: (0, 0)),       # dense operand, resident
                pl.BlockSpec((1, fdim), lambda i: (0, 0)),       # bias, resident
            ],
            out_specs=pl.BlockSpec((row_tile, fdim), lambda i: (i, 0)),
        ),
        compiler_params=pltpu.CompilerParams(
            dimension_semantics=("parallel",),   # v7x: shard row tiles across both TCs
        ),
        cost_estimate=pl.CostEstimate(
            flops=flops, transcendentals=0, bytes_accessed=bytes_accessed),
    )(adj_bf16, m_bf16, bias)


# ---------------------------------------------------------------------------
# Parameter prep (one-time, hoisted out of the per-call forward path)
# ---------------------------------------------------------------------------
def prepare_padded_params(params):
    """Pad weights to 128-lane slabs once; mu/logvar heads each get their own slab."""
    nfeat, nhid = params["w1"].shape
    latent = params["w_mu"].shape[1]
    hpad = _round_up(nhid, LANE)
    head_pad = _round_up(latent, LANE)
    opad = 2 * head_pad
    # Zero padding is numerically exact: padded h columns are relu(0+0)=0 and
    # only multiply zero rows of Wout; padded output columns are never read.
    w1 = jnp.zeros((nfeat, hpad), jnp.float32).at[:, :nhid].set(params["w1"])
    b1 = jnp.zeros((1, hpad), jnp.float32).at[:, :nhid].set(params["b1"])
    wout = (jnp.zeros((hpad, opad), jnp.float32)
            .at[:nhid, :latent].set(params["w_mu"])
            .at[:nhid, head_pad:head_pad + latent].set(params["w_logvar"]))
    bout = (jnp.zeros((1, opad), jnp.float32)
            .at[:, :latent].set(params["b_mu"])
            .at[:, head_pad:head_pad + latent].set(params["b_logvar"]))
    return {"w1": w1, "b1": b1, "wout": wout, "bout": bout}


# ---------------------------------------------------------------------------
# Forward
# ---------------------------------------------------------------------------
def encoder_forward(features, adj, padded, *, nhid, latent,
                    gridless_max_n=1024, row_tile=256):
    """Fused Encoder.forward. Returns (mu, logvar), each [N, latent]."""
    n, nfeat = features.shape
    w1, b1, wout, bout = padded["w1"], padded["b1"], padded["wout"], padded["bout"]
    opad = wout.shape[1]
    head_pad = opad // 2

    # adj is typically fixed across calls; if the caller already holds bf16 this is free.
    adj_bf16 = adj if adj.dtype == jnp.bfloat16 else adj.astype(jnp.bfloat16)

    # Pick the row-tiled path for larger graphs (adj no longer comfortably VMEM-resident).
    tm = None
    if n > gridless_max_n:
        for cand in (row_tile, 256, 128):   # 256 rows feeds v6e/v7x MXU, 128 fits v5e
            if cand <= n and n % cand == 0:
                tm = cand
                break
        # TODO(synk): pad N to a 128 multiple instead of falling back when indivisible.

    if tm is None:
        # -------- small-graph path: one fully fused, gridless kernel --------
        flops = (2 * n * nfeat * nhid + 2 * n * n * nhid
                 + 2 * n * nhid * (2 * latent) + 2 * n * n * (2 * latent))
        bytes_accessed = (_nbytes(features) + _nbytes(adj_bf16) + _nbytes(w1)
                          + _nbytes(b1) + _nbytes(wout) + _nbytes(bout) + n * opad * 4)
        vmem_spec = pl.BlockSpec(memory_space=pltpu.MemorySpace.VMEM)
        out = pl.pallas_call(
            _encoder_fused_kernel,
            out_shape=jax.ShapeDtypeStruct((n, opad), jnp.float32),
            in_specs=[vmem_spec] * 6,
            out_specs=vmem_spec,
            compiler_params=pltpu.CompilerParams(
                vmem_limit_bytes=_vmem_limit_bytes()),
            cost_estimate=pl.CostEstimate(
                flops=flops, transcendentals=0, bytes_accessed=bytes_accessed),
        )(features, adj_bf16, w1, b1, wout, bout)
    else:
        # -------- large-graph path: row-tiled two-stage propagation --------
        # Stage 1: h = relu(adj @ (x @ W1) + b1); x@W1 is tiny, done in f32.
        s1 = jnp.dot(features, w1, preferred_element_type=jnp.float32).astype(jnp.bfloat16)
        h = _propagate(adj_bf16, s1, b1, relu=True, row_tile=tm, true_cols=nhid)
        # Stage 2: out = adj @ (h @ Wout) + bout; h@Wout is tiny, done in f32.
        s2 = jnp.dot(h, wout, preferred_element_type=jnp.float32).astype(jnp.bfloat16)
        out = _propagate(adj_bf16, s2, bout, relu=False, row_tile=tm,
                         true_cols=2 * latent)

    mu = out[:, :latent]                       # slab 0 starts at lane 0
    logvar = out[:, head_pad:head_pad + latent]  # slab 1 starts at a 128-lane boundary
    return mu, logvar


# ---------------------------------------------------------------------------
# Test harness
# ---------------------------------------------------------------------------
def init_params(key, nfeat, nhid, latent_dim):
    """Deterministic glorot-uniform weights, zero biases (GCNConv shapes)."""
    def glorot(k, fan_in, fan_out):
        limit = jnp.sqrt(6.0 / (fan_in + fan_out))
        return jax.random.uniform(k, (fan_in, fan_out), jnp.float32, -limit, limit)

    k1, k2, k3 = jax.random.split(key, 3)
    return {
        "w1": glorot(k1, nfeat, nhid),
        "b1": jnp.zeros((1, nhid), jnp.float32),
        "w_mu": glorot(k2, nhid, latent_dim),
        "b_mu": jnp.zeros((1, latent_dim), jnp.float32),
        "w_logvar": glorot(k3, nhid, latent_dim),
        "b_logvar": jnp.zeros((1, latent_dim), jnp.float32),
    }


def make_normalized_adj(key, n):
    """Random symmetric graph with self-loops, symmetrically normalized (GCN-style)."""
    a = (jax.random.uniform(key, (n, n)) < 0.2).astype(jnp.float32)
    a = jnp.maximum(a, a.T)
    a = a + jnp.eye(n, dtype=jnp.float32)
    deg = jnp.sum(a, axis=1)
    d_inv_sqrt = 1.0 / jnp.sqrt(deg)
    return a * d_inv_sqrt[:, None] * d_inv_sqrt[None, :]


def reference_forward(features, adj, params):
    """Pure-JAX reference matching the kernel's bf16-propagation numerics."""
    adj_bf = adj.astype(jnp.bfloat16)
    s1 = jnp.dot(features, params["w1"],
                 preferred_element_type=jnp.float32).astype(jnp.bfloat16)
    h = jnp.dot(adj_bf, s1, preferred_element_type=jnp.float32) + params["b1"]
    h = jnp.maximum(h, 0.0)

    def head(w, b):
        s2 = jnp.dot(h, w, preferred_element_type=jnp.float32).astype(jnp.bfloat16)
        return jnp.dot(adj_bf, s2, preferred_element_type=jnp.float32) + b

    return head(params["w_mu"], params["b_mu"]), head(params["w_logvar"], params["b_logvar"])


if __name__ == "__main__":
    key = jax.random.PRNGKey(0)
    k_feat1, k_adj1, k_param, k_feat2, k_adj2 = jax.random.split(key, 5)

    nfeat, nhid, latent_dim = 16, 32, 8
    params = init_params(k_param, nfeat, nhid, latent_dim)
    padded = prepare_padded_params(params)     # one-time; outside the per-call hot path

    fwd = jax.jit(encoder_forward,
                  static_argnames=("nhid", "latent", "gridless_max_n", "row_tile"))

    # Case 1: small graph -> fully fused gridless kernel.
    n1 = 32
    feats1 = jax.random.normal(k_feat1, (n1, nfeat), jnp.float32)
    adj1 = make_normalized_adj(k_adj1, n1)
    mu1, lv1 = fwd(feats1, adj1, padded, nhid=nhid, latent=latent_dim)
    jax.block_until_ready((mu1, lv1))

    # Case 2: larger graph -> row-tiled two-stage path with a "parallel" row axis.
    n2 = 512
    feats2 = jax.random.normal(k_feat2, (n2, nfeat), jnp.float32)
    adj2 = make_normalized_adj(k_adj2, n2)
    mu2, lv2 = fwd(feats2, adj2, padded, nhid=nhid, latent=latent_dim,
                   gridless_max_n=128, row_tile=128)
    jax.block_until_ready((mu2, lv2))

    # Validate both paths against the bf16-matched pure-JAX reference.
    for mu, lv, feats, adj, n in ((mu1, lv1, feats1, adj1, n1),
                                  (mu2, lv2, feats2, adj2, n2)):
        mu_ref, lv_ref = reference_forward(feats, adj, params)
        assert mu.shape == (n, latent_dim) and lv.shape == (n, latent_dim)
        assert jnp.allclose(mu, mu_ref, atol=2e-3, rtol=2e-2), \
            float(jnp.max(jnp.abs(mu - mu_ref)))
        assert jnp.allclose(lv, lv_ref, atol=2e-3, rtol=2e-2), \
            float(jnp.max(jnp.abs(lv - lv_ref)))

    print("KERNEL_OK")
</pallas_src>

<mosaic_0001>
module attributes {stable_mosaic.version = 11 : i64} {
  func.func @_encoder_fused_kernel(%arg0: memref<32x16xf32, #tpu.memory_space<vmem>>, %arg1: memref<32x32xbf16, #tpu.memory_space<vmem>>, %arg2: memref<16x128xf32, #tpu.memory_space<vmem>>, %arg3: memref<1x128xf32, #tpu.memory_space<vmem>>, %arg4: memref<128x256xf32, #tpu.memory_space<vmem>>, %arg5: memref<1x256xf32, #tpu.memory_space<vmem>>, %arg6: memref<32x256xf32, #tpu.memory_space<vmem>>) attributes {dimension_semantics = [], scalar_prefetch = 0 : i64, scratch_operands = 0 : i64, tpu.core_type = #tpu.core_type<tc>} {
    %c0 = arith.constant 0 : index
    %c0_0 = arith.constant 0 : index
    %0 = vector.load %arg1[%c0, %c0_0] : memref<32x32xbf16, #tpu.memory_space<vmem>>, vector<32x32xbf16>
    %c0_1 = arith.constant 0 : index
    %c0_2 = arith.constant 0 : index
    %1 = vector.load %arg0[%c0_1, %c0_2] : memref<32x16xf32, #tpu.memory_space<vmem>>, vector<32x16xf32>
    %c0_3 = arith.constant 0 : index
    %c0_4 = arith.constant 0 : index
    %2 = vector.load %arg2[%c0_3, %c0_4] : memref<16x128xf32, #tpu.memory_space<vmem>>, vector<16x128xf32>
    %cst = arith.constant dense<0.000000e+00> : vector<32x128xf32>
    %3 = tpu.matmul %1, %2, %cst {dimension_numbers = #tpu.dot_dimension_numbers<[1], [0], [0], [1], [0, 0, 1, 1], [], []>} : vector<32x16xf32>, vector<16x128xf32>, vector<32x128xf32> -> vector<32x128xf32>
    %4 = arith.truncf %3 : vector<32x128xf32> to vector<32x128xbf16>
    %cst_5 = arith.constant dense<0.000000e+00> : vector<32x128xf32>
    %5 = tpu.matmul %0, %4, %cst_5 {dimension_numbers = #tpu.dot_dimension_numbers<[1], [0], [0], [1], [0, 0, 1, 1], [], []>} : vector<32x32xbf16>, vector<32x128xbf16>, vector<32x128xf32> -> vector<32x128xf32>
    %c0_6 = arith.constant 0 : index
    %c0_7 = arith.constant 0 : index
    %6 = vector.load %arg3[%c0_6, %c0_7] : memref<1x128xf32, #tpu.memory_space<vmem>>, vector<1x128xf32>
    %7 = vector.broadcast %6 : vector<1x128xf32> to vector<32x128xf32>
    %8 = arith.addf %5, %7 : vector<32x128xf32>
    %cst_8 = arith.constant 0.000000e+00 : f32
    %9 = vector.broadcast %cst_8 : f32 to vector<32x128xf32>
    %10 = arith.maximumf %8, %9 : vector<32x128xf32>
    %c0_9 = arith.constant 0 : index
    %c0_10 = arith.constant 0 : index
    %11 = vector.load %arg4[%c0_9, %c0_10] : memref<128x256xf32, #tpu.memory_space<vmem>>, vector<128x256xf32>
    %cst_11 = arith.constant dense<0.000000e+00> : vector<32x256xf32>
    %12 = tpu.matmul %10, %11, %cst_11 {dimension_numbers = #tpu.dot_dimension_numbers<[1], [0], [0], [1], [0, 0, 1, 1], [], []>} : vector<32x128xf32>, vector<128x256xf32>, vector<32x256xf32> -> vector<32x256xf32>
    %13 = arith.truncf %12 : vector<32x256xf32> to vector<32x256xbf16>
    %cst_12 = arith.constant dense<0.000000e+00> : vector<32x256xf32>
    %14 = tpu.matmul %0, %13, %cst_12 {dimension_numbers = #tpu.dot_dimension_numbers<[1], [0], [0], [1], [0, 0, 1, 1], [], []>} : vector<32x32xbf16>, vector<32x256xbf16>, vector<32x256xf32> -> vector<32x256xf32>
    %c0_13 = arith.constant 0 : index
    %c0_14 = arith.constant 0 : index
    %15 = vector.load %arg5[%c0_13, %c0_14] : memref<1x256xf32, #tpu.memory_space<vmem>>, vector<1x256xf32>
    %16 = vector.broadcast %15 : vector<1x256xf32> to vector<32x256xf32>
    %17 = arith.addf %14, %16 : vector<32x256xf32>
    %c0_15 = arith.constant 0 : index
    %c0_16 = arith.constant 0 : index
    %18 = vector.load %arg6[%c0_15, %c0_16] : memref<32x256xf32, #tpu.memory_space<vmem>>, vector<32x256xf32>
    tpu.vector_store %arg6[%c0_15, %c0_16], %17 {strides = array<i32>} : memref<32x256xf32, #tpu.memory_space<vmem>>, vector<32x256xf32>,
    return
  }
}

</mosaic_0001>

<llo_original>
// kernel: encoder_forward.1
$region0: #{encoder_forward.1}
  #allocation0 [shape = 'u32[]', space=smem, size = 0x4, offset = 0x4, fixed_abs, tag = 'smem constant byte address 0x4 - core index']
  #allocation1 [shape = 'u32[144,128]{1,0:T(1,128)}', space=vmem, size = 0x12000, scoped, tag = 'internal scratch']
  %s0 = inlined_call_operand.vmem [shape: f32[32,16], index: 0, kind: input, shape index: {}]
  %s1 = inlined_call_operand.vmem [shape: bf16[32,32], index: 1, kind: input, shape index: {}]
  %s2 = inlined_call_operand.vmem [shape: f32[16,128], index: 2, kind: input, shape index: {}]
  %s3 = inlined_call_operand.vmem [shape: f32[1,128], index: 3, kind: input, shape index: {}]
  %s4 = inlined_call_operand.hbm [shape: f32[128,256], index: 4, kind: input, shape index: {}]
  %s5 = inlined_call_operand.vmem [shape: f32[1,256], index: 5, kind: input, shape index: {}]
  %s6 = inlined_call_operand.vmem [shape: f32[32,256], index: 6, kind: output, shape index: {}]
  %s7 = sld [smem:[#allocation0]]
  $region38: #{encoder_forward.1} parent=0
    _
  %s9 = ssub.s32 1, %s7
  %s10 = scalar_select 0, %s9, %s7
  $region1: #{encoder_forward.1} parent=0
    #allocation2 [shape = 'u8[131072]{0}', space=vmem, size = 0x20000, scoped, tag = 'input window, operand 4, single buffered']
    #allocation3 [shape = 's32[1]{0}', space=sflag, size = 0x4, scoped, tag = 'scoped memory for encoder_forward.1']
    %11 = vsyncpa [#allocation3], 0
    // Predicated region
    $region2: #{encoder_forward.1} parent=1 // pred_check
      _
    $region3: #{encoder_forward.1} parent=1 // pred_check_branch
      %13 = sbr.rel (0) target = $region5
    $region4: #{encoder_forward.1} parent=1 // pred_region
      _
    $region5: #{encoder_forward.1} parent=1 // pred_fallthru
      _
    // Predicated region
    $region6: #{encoder_forward.1} parent=1 // pred_check
      _
    $region7: #{encoder_forward.1} parent=1 // pred_check_branch
      %15 = sbr.rel (0) target = $region9
    $region8: #{encoder_forward.1} parent=1 // pred_region
      _
    $region9: #{encoder_forward.1} parent=1 // pred_fallthru
      _
    // Predicated region
    $region10: #{encoder_forward.1} parent=1 // pred_check
      _
    $region11: #{encoder_forward.1} parent=1 // pred_check_branch
      %17 = sbr.rel (0) target = $region13
    $region12: #{encoder_forward.1} parent=1 // pred_region
      _
    $region13: #{encoder_forward.1} parent=1 // pred_fallthru
      _
    // Predicated region
    $region14: #{encoder_forward.1} parent=1 // pred_check
      _
    $region15: #{encoder_forward.1} parent=1 // pred_check_branch
      %19 = sbr.rel (0) target = $region17
    $region16: #{encoder_forward.1} parent=1 // pred_region
      _
    $region17: #{encoder_forward.1} parent=1 // pred_fallthru
      _
    // Predicated region
    $region18: #{encoder_forward.1} parent=1 // pred_check
      _
    $region19: #{encoder_forward.1} parent=1 // pred_check_branch
      %21 = sbr.rel (0) target = $region21
    $region20: #{encoder_forward.1} parent=1 // pred_region
      %s23 = ssub.s32 4096, 4096
      %24 = vsyncadd [#allocation3], %s23
      %s25 = sshll.u32 [#allocation2], 4
      %s26 = int_to_ptr.vmem [resolvable:$true] %s25
      %31 = dma.hbm_to_vmem [thread:$0]  %s4, 4096, %s26, [#allocation3], 256, 256, 16
    $region21: #{encoder_forward.1} parent=1 // pred_fallthru
      _
    // Predicated region
    $region22: #{encoder_forward.1} parent=1 // pred_check
      _
    $region23: #{encoder_forward.1} parent=1 // pred_check_branch
      %33 = sbr.rel (0) target = $region25
    $region24: #{encoder_forward.1} parent=1 // pred_region
      _
    $region25: #{encoder_forward.1} parent=1 // pred_fallthru
      _
    // Predicated region
    $region26: #{encoder_forward.1} parent=1 // pred_check
      _
    $region27: #{encoder_forward.1} parent=1 // pred_check_branch
      %35 = sbr.rel (0) target = $region29
    $region28: #{encoder_forward.1} parent=1 // pred_region
      %36 = dma.done [#allocation3], 4096
    $region29: #{encoder_forward.1} parent=1 // pred_fallthru
      _
    %v38 = vld [vmem:[%s1] sm:$0xf]
    %v39 = vld [vmem:[%s1 + $0x4] sm:$0xf]
    %v40 = vld [vmem:[%s1 + $0x8] sm:$0xf]
    %v41 = vld [vmem:[%s1 + $0xc] sm:$0xf]
    %v42 = vld [vmem:[%s0] sm:$0xff]
    %v43 = vld [vmem:[%s0 + $0x8] sm:$0xff]
    %v44 = vld [vmem:[%s0 + $0x10] sm:$0xff]
    %v45 = vld [vmem:[%s0 + $0x18] sm:$0xff]
    %v46 = vld [vmem:[%s2] sm:$0xff]
    %v47 = vld [vmem:[%s2 + $0x8] sm:$0xff]
    %vm48 = vcmask 130048
    %v50 = vsel %vm48, %v42, 0
    %v53 = vsel %vm48, %v43, 0
    %v56 = vsel %vm48, %v44, 0
    %v59 = vsel %vm48, %v45, 0
    %61 = vmatprep.subr.mxu0 0.0
    %62 = vmatpush1.msra.mxu0 0.0
    %63 = vmatprep.subr.mxu0 0.0
    %64 = vmatpush1.msra.mxu0 0.0
    %65 = vmatprep.subr.mxu0 0.0
    %66 = vmatpush1.msra.mxu0 0.0
    %67 = vmatprep.subr.mxu0 0.0
    %68 = vmatpush1.msra.mxu0 0.0
    %69 = vmatprep.subr.mxu0 0.0
    %70 = vmatpush1.msra.mxu0 0.0
    %71 = vmatprep.subr.mxu0 0.0
    %72 = vmatpush1.msra.mxu0 0.0
    %73 = vmatprep.subr.mxu0 0.0
    %74 = vmatpush1.msra.mxu0 0.0
    %75 = vmatprep.subr.mxu0 0.0
    %76 = vmatpush1.msra.mxu0 0.0
    %77 = vmatprep.subr.mxu0 0.0
    %78 = vmatpush1.msra.mxu0 0.0
    %79 = vmatprep.subr.mxu0 0.0
    %80 = vmatpush1.msra.mxu0 0.0
    %81 = vmatprep.subr.mxu0 0.0
    %82 = vmatpush1.msra.mxu0 0.0
    %83 = vmatprep.subr.mxu0 0.0
    %84 = vmatpush1.msra.mxu0 0.0
    %85 = vmatprep.subr.mxu0 0.0
    %86 = vmatpush1.msra.mxu0 0.0
    %87 = vmatprep.subr.mxu0 0.0
    %88 = vmatpush1.msra.mxu0 0.0
    %89 = vmatprep.subr.mxu0 0.0
    %90 = vmatpush1.msra.mxu0 %v47
    %91 = vmatprep.subr.mxu0 0.0
    %92 = vmatpush1.msra.mxu0 %v46
    %93 = vmatprep.subr.mxu0 0.0
    %94 = vmatpush2.msra.mxu0 0.0
    %95 = vmatprep.subr.mxu0 0.0
    %96 = vmatpush2.msra.mxu0 0.0
    %97 = vmatprep.subr.mxu0 0.0
    %98 = vmatpush2.msra.mxu0 0.0
    %99 = vmatprep.subr.mxu0 0.0
    %100 = vmatpush2.msra.mxu0 0.0
    %101 = vmatprep.subr.mxu0 0.0
    %102 = vmatpush2.msra.mxu0 0.0
    %103 = vmatprep.subr.mxu0 0.0
    %104 = vmatpush2.msra.mxu0 0.0
    %105 = vmatprep.subr.mxu0 0.0
    %106 = vmatpush2.msra.mxu0 0.0
    %107 = vmatprep.subr.mxu0 0.0
    %108 = vmatpush2.msra.mxu0 0.0
    %109 = vmatprep.subr.mxu0 0.0
    %110 = vmatpush2.msra.mxu0 0.0
    %111 = vmatprep.subr.mxu0 0.0
    %112 = vmatpush2.msra.mxu0 0.0
    %113 = vmatprep.subr.mxu0 0.0
    %114 = vmatpush2.msra.mxu0 0.0
    %115 = vmatprep.subr.mxu0 0.0
    %116 = vmatpush2.msra.mxu0 0.0
    %117 = vmatprep.subr.mxu0 0.0
    %118 = vmatpush2.msra.mxu0 0.0
    %119 = vmatprep.subr.mxu0 0.0
    %120 = vmatpush2.msra.mxu0 0.0
    %121 = vmatprep.subr.mxu0 0.0
    %122 = vmatpush2.msra.mxu0 0.0
    %123 = vmatprep.subr.mxu0 0.0
    %124 = vmatpush2.msra.mxu0 0.0
    %125 = vmatprep.mubr.f32.mxu0 0.0
    %126 = vmatmul.mubr.f32.gmra.mxu0 %v50
    %v127 = vpop.f32.mrf.mxu0
    %v128 = vadd.f32 0.0, %v127
    %v129 = vpop.f32.mrf.mxu0
    %130 = vmatprep.mubr.f32.mxu0 0.0
    %131 = vmatmul.mubr.f32.gmra.mxu0 %v53
    %v132 = vpop.f32.mrf.mxu0
    %v133 = vadd.f32 0.0, %v132
    %v134 = vpop.f32.mrf.mxu0
    %135 = vmatprep.mubr.f32.mxu0 0.0
    %136 = vmatmul.mubr.f32.gmra.mxu0 %v56
    %v137 = vpop.f32.mrf.mxu0
    %v138 = vadd.f32 0.0, %v137
    %v139 = vpop.f32.mrf.mxu0
    %140 = vmatprep.mubr.f32.mxu0 0.0
    %141 = vmatmul.mubr.f32.gmra.mxu0 %v59
    %v142 = vpop.f32.mrf.mxu0
    %v143 = vadd.f32 0.0, %v142
    %v144 = vpop.f32.mrf.mxu0
    %145 = vdwg.mxu0
    %v146 = vpack.c.bf16 %v133, %v128
    %v147 = vpack.c.bf16 %v143, %v138
    %v148 = vld [vmem:[%s3] sm:$0x1]
    %v150 = vlaneseq
    %v151 = vshrl.u32 %v150, 7
    %v152 = vsub.s32 0, %v151
    %v153 = vrot.slane %v148, %v152
    %v159 = vunpack.c.l.b16 %v38
    %v160 = vunpack.c.l.b16 %v39
    %v161 = vunpack.c.l.b16 %v40
    %v162 = vunpack.c.l.b16 %v41
    %v163 = vpack.c.b16 %v160, %v159
    %v164 = vpack.c.b16 %v162, %v161
    %vm165 = vcmask 261120
    %v167 = vsel %vm165, %v163, 0
    %v170 = vsel %vm165, %v164, 0
    %172 = vmatprep.subr.bf16.mxu0 0
    %173 = vmatpush1.bf16.msra.mxu0 0
    %174 = vmatprep.subr.bf16.mxu0 0
    %175 = vmatpush1.bf16.msra.mxu0 0
    %176 = vmatprep.subr.bf16.mxu0 0
    %177 = vmatpush1.bf16.msra.mxu0 0
    %178 = vmatprep.subr.bf16.mxu0 0
    %179 = vmatpush1.bf16.msra.mxu0 0
    %180 = vmatprep.subr.bf16.mxu0 0
    %181 = vmatpush1.bf16.msra.mxu0 0
    %182 = vmatprep.subr.bf16.mxu0 0
    %183 = vmatpush1.bf16.msra.mxu0 0
    %184 = vmatprep.subr.bf16.mxu0 0
    %185 = vmatpush1.bf16.msra.mxu0 %v147
    %186 = vmatprep.subr.bf16.mxu0 0
    %187 = vmatpush1.bf16.msra.mxu0 %v146
    %188 = vmatprep.subr.bf16.mxu0 0
    %189 = vmatpush2.bf16.msra.mxu0 0
    %190 = vmatprep.subr.bf16.mxu0 0
    %191 = vmatpush2.bf16.msra.mxu0 0
    %192 = vmatprep.subr.bf16.mxu0 0
    %193 = vmatpush2.bf16.msra.mxu0 0
    %194 = vmatprep.subr.bf16.mxu0 0
    %195 = vmatpush2.bf16.msra.mxu0 0
    %196 = vmatprep.subr.bf16.mxu0 0
    %197 = vmatpush2.bf16.msra.mxu0 0
    %198 = vmatprep.subr.bf16.mxu0 0
    %199 = vmatpush2.bf16.msra.mxu0 0
    %200 = vmatprep.subr.bf16.mxu0 0
    %201 = vmatpush2.bf16.msra.mxu0 0
    %202 = vmatprep.subr.bf16.mxu0 0
    %203 = vmatpush2.bf16.msra.mxu0 0
    %204 = vmatprep.mubr.bf16.mxu0 0
    %205 = vmatmul.mubr.bf16.gmra.mxu0 %v167
    %v206 = vpop.f32.mrf.mxu0
    %v207 = vadd.f32 %v153, %v206
    %v208 = vpop.f32.mrf.mxu0
    %v209 = vpop.f32.mrf.mxu0
    %v210 = vadd.f32 %v153, %v209
    %v211 = vpop.f32.mrf.mxu0
    %212 = vmatprep.mubr.bf16.mxu0 0
    %213 = vmatmul.mubr.bf16.gmra.mxu0 %v170
    %v214 = vpop.f32.mrf.mxu0
    %v215 = vadd.f32 %v153, %v214
    %v216 = vpop.f32.mrf.mxu0
    %v217 = vpop.f32.mrf.mxu0
    %v218 = vadd.f32 %v153, %v217
    %v219 = vpop.f32.mrf.mxu0
    %220 = vdwg.mxu0
    %v221 = vmax.f32 %v207, 0.0
    %v222 = vmax.f32 %v210, 0.0
    %v223 = vmax.f32 %v215, 0.0
    %v224 = vmax.f32 %v218, 0.0
    %v225 = vld [vmem:[#allocation2] sm:$0xff]
    %v226 = vld [vmem:[#allocation2 + $0x8] sm:$0xff]
    %v227 = vld [vmem:[#allocation2 + $0x10] sm:$0xff]
    %v228 = vld [vmem:[#allocation2 + $0x18] sm:$0xff]
    %v229 = vld [vmem:[#allocation2 + $0x20] sm:$0xff]
    %v230 = vld [vmem:[#allocation2 + $0x28] sm:$0xff]
    %v231 = vld [vmem:[#allocation2 + $0x30] sm:$0xff]
    %v232 = vld [vmem:[#allocation2 + $0x38] sm:$0xff]
    %v233 = vld [vmem:[#allocation2 + $0x40] sm:$0xff]
    %v234 = vld [vmem:[#allocation2 + $0x48] sm:$0xff]
    %v235 = vld [vmem:[#allocation2 + $0x50] sm:$0xff]
    %v236 = vld [vmem:[#allocation2 + $0x58] sm:$0xff]
    %v237 = vld [vmem:[#allocation2 + $0x60] sm:$0xff]
    %v238 = vld [vmem:[#allocation2 + $0x68] sm:$0xff]
    %v239 = vld [vmem:[#allocation2 + $0x70] sm:$0xff]
    %v240 = vld [vmem:[#allocation2 + $0x78] sm:$0xff]
    %v241 = vld [vmem:[#allocation2 + $0x80] sm:$0xff]
    %v242 = vld [vmem:[#allocation2 + $0x88] sm:$0xff]
    %v243 = vld [vmem:[#allocation2 + $0x90] sm:$0xff]
    %v244 = vld [vmem:[#allocation2 + $0x98] sm:$0xff]
    %v245 = vld [vmem:[#allocation2 + $0xa0] sm:$0xff]
    %v246 = vld [vmem:[#allocation2 + $0xa8] sm:$0xff]
    %v247 = vld [vmem:[#allocation2 + $0xb0] sm:$0xff]
    %v248 = vld [vmem:[#allocation2 + $0xb8] sm:$0xff]
    %v249 = vld [vmem:[#allocation2 + $0xc0] sm:$0xff]
    %v250 = vld [vmem:[#allocation2 + $0xc8] sm:$0xff]
    %v251 = vld [vmem:[#allocation2 + $0xd0] sm:$0xff]
    %v252 = vld [vmem:[#allocation2 + $0xd8] sm:$0xff]
    %v253 = vld [vmem:[#allocation2 + $0xe0] sm:$0xff]
    %v254 = vld [vmem:[#allocation2 + $0xe8] sm:$0xff]
    %v255 = vld [vmem:[#allocation2 + $0xf0] sm:$0xff]
    %v256 = vld [vmem:[#allocation2 + $0xf8] sm:$0xff]
    %257 = vmatprep.subr.mxu0 %v256
    %258 = vmatpush1.msra.mxu0 %v255
    %259 = vmatprep.subr.mxu0 %v254
    %260 = vmatpush1.msra.mxu0 %v253
    %261 = vmatprep.subr.mxu0 %v252
    %262 = vmatpush1.msra.mxu0 %v251
    %263 = vmatprep.subr.mxu0 %v250
    %264 = vmatpush1.msra.mxu0 %v249
    %265 = vmatprep.subr.mxu0 %v248
    %266 = vmatpush1.msra.mxu0 %v247
    %267 = vmatprep.subr.mxu0 %v246
    %268 = vmatpush1.msra.mxu0 %v245
    %269 = vmatprep.subr.mxu0 %v244
    %270 = vmatpush1.msra.mxu0 %v243
    %271 = vmatprep.subr.mxu0 %v242
    %272 = vmatpush1.msra.mxu0 %v241
    %273 = vmatprep.subr.mxu0 %v240
    %274 = vmatpush1.msra.mxu0 %v239
    %275 = vmatprep.subr.mxu0 %v238
    %276 = vmatpush1.msra.mxu0 %v237
    %277 = vmatprep.subr.mxu0 %v236
    %278 = vmatpush1.msra.mxu0 %v235
    %279 = vmatprep.subr.mxu0 %v234
    %280 = vmatpush1.msra.mxu0 %v233
    %281 = vmatprep.subr.mxu0 %v232
    %282 = vmatpush1.msra.mxu0 %v231
    %283 = vmatprep.subr.mxu0 %v230
    %284 = vmatpush1.msra.mxu0 %v229
    %285 = vmatprep.subr.mxu0 %v228
    %286 = vmatpush1.msra.mxu0 %v227
    %287 = vmatprep.subr.mxu0 %v226
    %288 = vmatpush1.msra.mxu0 %v225
    %289 = vmatprep.subr.mxu0 0.0
    %290 = vmatpush2.msra.mxu0 0.0
    %291 = vmatprep.subr.mxu0 0.0
    %292 = vmatpush2.msra.mxu0 0.0
    %293 = vmatprep.subr.mxu0 0.0
    %294 = vmatpush2.msra.mxu0 0.0
    %295 = vmatprep.subr.mxu0 0.0
    %296 = vmatpush2.msra.mxu0 0.0
    %297 = vmatprep.subr.mxu0 0.0
    %298 = vmatpush2.msra.mxu0 0.0
    %299 = vmatprep.subr.mxu0 0.0
    %300 = vmatpush2.msra.mxu0 0.0
    %301 = vmatprep.subr.mxu0 0.0
    %302 = vmatpush2.msra.mxu0 0.0
    %303 = vmatprep.subr.mxu0 0.0
    %304 = vmatpush2.msra.mxu0 0.0
    %305 = vmatprep.subr.mxu0 0.0
    %306 = vmatpush2.msra.mxu0 0.0
    %307 = vmatprep.subr.mxu0 0.0
    %308 = vmatpush2.msra.mxu0 0.0
    %309 = vmatprep.subr.mxu0 0.0
    %310 = vmatpush2.msra.mxu0 0.0
    %311 = vmatprep.subr.mxu0 0.0
    %312 = vmatpush2.msra.mxu0 0.0
    %313 = vmatprep.subr.mxu0 0.0
    %314 = vmatpush2.msra.mxu0 0.0
    %315 = vmatprep.subr.mxu0 0.0
    %316 = vmatpush2.msra.mxu0 0.0
    %317 = vmatprep.subr.mxu0 0.0
    %318 = vmatpush2.msra.mxu0 0.0
    %319 = vmatprep.subr.mxu0 0.0
    %320 = vmatpush2.msra.mxu0 0.0
    %321 = vmatprep.mubr.f32.mxu0 0.0
    %322 = vmatmul.mubr.f32.gmra.mxu0 %v221
    %v323 = vpop.f32.mrf.mxu0
    %v324 = vadd.f32 0.0, %v323
    %v325 = vpop.f32.mrf.mxu0
    %v326 = vadd.f32 0.0, %v325
    %327 = vmatprep.mubr.f32.mxu0 0.0
    %328 = vmatmul.mubr.f32.gmra.mxu0 %v222
    %v329 = vpop.f32.mrf.mxu0
    %v330 = vadd.f32 0.0, %v329
    %v331 = vpop.f32.mrf.mxu0
    %v332 = vadd.f32 0.0, %v331
    %333 = vmatprep.mubr.f32.mxu0 0.0
    %334 = vmatmul.mubr.f32.gmra.mxu0 %v223
    %v335 = vpop.f32.mrf.mxu0
    %v336 = vadd.f32 0.0, %v335
    %v337 = vpop.f32.mrf.mxu0
    %v338 = vadd.f32 0.0, %v337
    %339 = vmatprep.mubr.f32.mxu0 0.0
    %340 = vmatmul.mubr.f32.gmra.mxu0 %v224
    %v341 = vpop.f32.mrf.mxu0
    %v342 = vadd.f32 0.0, %v341
    %v343 = vpop.f32.mrf.mxu0
    %v344 = vadd.f32 0.0, %v343
    %345 = vdwg.mxu0
    %v346 = vpack.c.bf16 %v330, %v324
    %v347 = vpack.c.bf16 %v332, %v326
    %v348 = vpack.c.bf16 %v342, %v336
    %v349 = vpack.c.bf16 %v344, %v338
    %v350 = vld [vmem:[%s5] sm:$0x3]
    %v352 = vlaneseq
    %v353 = vshrl.u32 %v352, 7
    %v354 = vsub.s32 0, %v353
    %v355 = vrot.slane %v350, %v354
    %v356 = vlaneseq
    %v357 = vshrl.u32 %v356, 7
    %v358 = vsub.s32 1, %v357
    %v359 = vrot.slane %v350, %v358
    %362 = vmatprep.subr.bf16.mxu0 0
    %363 = vmatpush1.bf16.msra.mxu0 0
    %364 = vmatprep.subr.bf16.mxu0 0
    %365 = vmatpush1.bf16.msra.mxu0 0
    %366 = vmatprep.subr.bf16.mxu0 0
    %367 = vmatpush1.bf16.msra.mxu0 0
    %368 = vmatprep.subr.bf16.mxu0 0
    %369 = vmatpush1.bf16.msra.mxu0 0
    %370 = vmatprep.subr.bf16.mxu0 0
    %371 = vmatpush1.bf16.msra.mxu0 0
    %372 = vmatprep.subr.bf16.mxu0 0
    %373 = vmatpush1.bf16.msra.mxu0 0
    %374 = vmatprep.subr.bf16.mxu0 %v349
    %375 = vmatpush1.bf16.msra.mxu0 %v348
    %376 = vmatprep.subr.bf16.mxu0 %v347
    %377 = vmatpush1.bf16.msra.mxu0 %v346
    %378 = vmatprep.subr.bf16.mxu0 0
    %379 = vmatpush2.bf16.msra.mxu0 0
    %380 = vmatprep.subr.bf16.mxu0 0
    %381 = vmatpush2.bf16.msra.mxu0 0
    %382 = vmatprep.subr.bf16.mxu0 0
    %383 = vmatpush2.bf16.msra.mxu0 0
    %384 = vmatprep.subr.bf16.mxu0 0
    %385 = vmatpush2.bf16.msra.mxu0 0
    %386 = vmatprep.subr.bf16.mxu0 0
    %387 = vmatpush2.bf16.msra.mxu0 0
    %388 = vmatprep.subr.bf16.mxu0 0
    %389 = vmatpush2.bf16.msra.mxu0 0
    %390 = vmatprep.subr.bf16.mxu0 0
    %391 = vmatpush2.bf16.msra.mxu0 0
    %392 = vmatprep.subr.bf16.mxu0 0
    %393 = vmatpush2.bf16.msra.mxu0 0
    %394 = vmatprep.mubr.bf16.mxu0 0
    %395 = vmatmul.mubr.bf16.gmra.mxu0 %v167
    %v396 = vpop.f32.mrf.mxu0
    %v397 = vadd.f32 %v355, %v396
    %v398 = vpop.f32.mrf.mxu0
    %v399 = vadd.f32 %v359, %v398
    %v400 = vpop.f32.mrf.mxu0
    %v401 = vadd.f32 %v355, %v400
    %v402 = vpop.f32.mrf.mxu0
    %v403 = vadd.f32 %v359, %v402
    %404 = vmatprep.mubr.bf16.mxu0 0
    %405 = vmatmul.mubr.bf16.gmra.mxu0 %v170
    %v406 = vpop.f32.mrf.mxu0
    %v407 = vadd.f32 %v355, %v406
    %v408 = vpop.f32.mrf.mxu0
    %v409 = vadd.f32 %v359, %v408
    %v410 = vpop.f32.mrf.mxu0
    %v411 = vadd.f32 %v355, %v410
    %v412 = vpop.f32.mrf.mxu0
    %v413 = vadd.f32 %v359, %v412
    %414 = vdwg.mxu0
    %415 = vst [vmem:[%s6] sm:$0xff] %v397
    %416 = vst [vmem:[%s6 + $0x8] sm:$0xff] %v399
    %417 = vst [vmem:[%s6 + $0x10] sm:$0xff] %v401
    %418 = vst [vmem:[%s6 + $0x18] sm:$0xff] %v403
    %419 = vst [vmem:[%s6 + $0x20] sm:$0xff] %v407
    %420 = vst [vmem:[%s6 + $0x28] sm:$0xff] %v409
    %421 = vst [vmem:[%s6 + $0x30] sm:$0xff] %v411
    %422 = vst [vmem:[%s6 + $0x38] sm:$0xff] %v413
    // Predicated region
    $region30: #{encoder_forward.1} parent=1 // pred_check
      _
    $region31: #{encoder_forward.1} parent=1 // pred_check_branch
      %424 = sbr.rel (0) target = $region33
    $region32: #{encoder_forward.1} parent=1 // pred_region
      _
    $region33: #{encoder_forward.1} parent=1 // pred_fallthru
      _
    // Predicated region
    $region34: #{encoder_forward.1} parent=1 // pred_check
      _
    $region35: #{encoder_forward.1} parent=1 // pred_check_branch
      %426 = sbr.rel (0) target = $region37
    $region36: #{encoder_forward.1} parent=1 // pred_region
      _
    $region37: #{encoder_forward.1} parent=1 // pred_fallthru
      _
    %427 = vsyncpa [#allocation3], 1

</llo_original>
